<compile_context>
chip_gen: v5e
topology: v5e:2x2
jax: 0.10.0
libtpu: 0.0.40
codegen_flags: <defaults>
</compile_context>

<pallas_src>
import jax
import jax.numpy as jnp
from jax.experimental import pallas as pl
from jax.experimental.pallas import tpu as pltpu

_LANE = 128
_MAX_LANE_TILE = 2048                    # >=1024 lanes already ~86% of HBM roofline
_STREAM_VMEM_BUDGET = 12 * 1024 * 1024   # fits v5e's 16 MiB default scoped VMEM
_VMEM_LIMIT_BYTES = 32 * 1024 * 1024     # explicit scoped-VMEM limit (safe on v5e/v6e/v7x)


def _nlinear_moe_kernel(x_ref, w_ref, b_ref, corr_ref, o_ref):
    # x_ref    : (S, T)  lane tile of the input (columns = channels or folded B*C)
    # w_ref    : (P, S)  full weight, resident across grid steps
    # b_ref    : (P, 1)  bias column, resident
    # corr_ref : (P, 1)  1 - rowsum(W), resident (rank-1 correction factor)
    # o_ref    : (P, T)  output tile
    x = x_ref[...]                                              # (S, T)
    seq_last = jnp.max(x, axis=0, keepdims=True)                # (1, T), XLU reduce
    out = jnp.dot(w_ref[...], x,
                  preferred_element_type=jnp.float32)           # (P, T), MXU
    out = out + b_ref[...] + corr_ref[...] * seq_last           # fused VPU epilogue
    o_ref[...] = out.astype(o_ref.dtype)


def _round_up(n, m):
    return ((n + m - 1) // m) * m


def _choose_lane_tile(n_lanes, s, p, other_parallel_steps=1, dtype_bytes=4):
    """Pick lane tile T (multiple of 128).  Caller pads the lane extent up to a
    multiple of T, so T never collapses to 128 for awkward lane counts."""
    work = _round_up(max(n_lanes, _LANE), _LANE)
    # Per-lane VMEM across pipelined buffers: x tile (<=3 bufs) + out tile (2 bufs).
    per_lane = (3 * s + 2 * p) * dtype_bytes
    t = (_STREAM_VMEM_BUDGET // per_lane) // _LANE * _LANE
    t = max(_LANE, min(t, _MAX_LANE_TILE, work))
    # Guarantee >= 2 total grid steps when there is enough work (megacore on v7x).
    steps = -(-work // t)
    if other_parallel_steps * steps < 2 and work >= 2 * _LANE:
        t = _round_up(work // 2, _LANE)
    return t


def _nlinear_moe_batched(x, weight, bias_col, corr):
    """C >= 128 path: keep x as [B, S, C]; grid over (batch, channel tiles)."""
    B, S, C = x.shape
    P = weight.shape[0]

    c_tile = _choose_lane_tile(C, S, P, other_parallel_steps=B)
    C_pad = _round_up(max(C, _LANE), c_tile)
    c_steps = C_pad // c_tile
    grid_steps = B * c_steps

    if C_pad != C:
        x = jnp.pad(x, ((0, 0), (0, 0), (0, C_pad - C)))

    if grid_steps >= 4:
        x_spec = pl.BlockSpec((pl.Squeezed(), S, c_tile), lambda b, j: (b, 0, j),
                              pipeline_mode=pl.Buffered(3))
    else:
        x_spec = pl.BlockSpec((pl.Squeezed(), S, c_tile), lambda b, j: (b, 0, j))
    w_spec = pl.BlockSpec((P, S), lambda b, j: (0, 0), pipeline_mode=pl.Buffered(1))
    b_spec = pl.BlockSpec((P, 1), lambda b, j: (0, 0), pipeline_mode=pl.Buffered(1))
    c_spec = pl.BlockSpec((P, 1), lambda b, j: (0, 0), pipeline_mode=pl.Buffered(1))
    o_spec = pl.BlockSpec((pl.Squeezed(), P, c_tile), lambda b, j: (b, 0, j))

    cost = pl.CostEstimate(
        flops=2 * P * S * B * C_pad,
        transcendentals=0,
        bytes_accessed=(B * S * C_pad + B * P * C_pad + P * S + 2 * P) * 4)

    out = pl.pallas_call(
        _nlinear_moe_kernel,
        out_shape=jax.ShapeDtypeStruct((B, P, C_pad), x.dtype),
        grid_spec=pltpu.PrefetchScalarGridSpec(
            num_scalar_prefetch=0,
            grid=(B, c_steps),
            in_specs=[x_spec, w_spec, b_spec, c_spec],
            out_specs=o_spec),
        compiler_params=pltpu.CompilerParams(
            dimension_semantics=("parallel", "parallel"),
            vmem_limit_bytes=_VMEM_LIMIT_BYTES),
        cost_estimate=cost,
    )(x, weight, bias_col, corr)

    return out[:, :, :C]


def _nlinear_moe_fold(x, weight, bias_col, corr):
    """C < 128 path: fold batch into lanes so tiles stay lane-dense."""
    B, S, C = x.shape
    P = weight.shape[0]
    BC = B * C

    lane_tile = _choose_lane_tile(BC, S, P)
    BC_pad = _round_up(max(BC, _LANE), lane_tile)
    grid_steps = BC_pad // lane_tile

    # Fold batch into the lane axis: [B, S, C] -> [S, B*C] (only for small C, where
    # per-batch channel tiles would waste >=2x bandwidth on lane padding).
    x_slab = jnp.transpose(x, (1, 0, 2)).reshape(S, BC)
    if BC_pad != BC:
        x_slab = jnp.pad(x_slab, ((0, 0), (0, BC_pad - BC)))

    if grid_steps >= 4:
        x_spec = pl.BlockSpec((S, lane_tile), lambda j: (0, j),
                              pipeline_mode=pl.Buffered(3))
    else:
        x_spec = pl.BlockSpec((S, lane_tile), lambda j: (0, j))
    w_spec = pl.BlockSpec((P, S), lambda j: (0, 0), pipeline_mode=pl.Buffered(1))
    b_spec = pl.BlockSpec((P, 1), lambda j: (0, 0), pipeline_mode=pl.Buffered(1))
    c_spec = pl.BlockSpec((P, 1), lambda j: (0, 0), pipeline_mode=pl.Buffered(1))
    o_spec = pl.BlockSpec((P, lane_tile), lambda j: (0, j))

    cost = pl.CostEstimate(
        flops=2 * P * S * BC_pad,
        transcendentals=0,
        bytes_accessed=(S * BC_pad + P * BC_pad + P * S + 2 * P) * 4)

    out_slab = pl.pallas_call(
        _nlinear_moe_kernel,
        out_shape=jax.ShapeDtypeStruct((P, BC_pad), x.dtype),
        grid_spec=pltpu.PrefetchScalarGridSpec(
            num_scalar_prefetch=0,
            grid=(grid_steps,),
            in_specs=[x_spec, w_spec, b_spec, c_spec],
            out_specs=o_spec),
        compiler_params=pltpu.CompilerParams(
            dimension_semantics=("parallel",),
            vmem_limit_bytes=_VMEM_LIMIT_BYTES),
        cost_estimate=cost,
    )(x_slab, weight, bias_col, corr)

    # Unfold lanes back (padded garbage columns are sliced off here).
    return out_slab[:, :BC].reshape(P, B, C).transpose(1, 0, 2)


def n_linear_moe_forward(x, weight, bias):
    """N_Linear_MOE forward (individual=False): x [B,S,C], weight [P,S], bias [P] -> [B,P,C]."""
    B, S, C = x.shape
    P = weight.shape[0]
    weight = weight.astype(jnp.float32)
    bias_col = bias.reshape(P, 1).astype(jnp.float32)
    # out = W@x + b + (1 - rowsum(W)) * seq_last  ==  W@(x - seq_last) + b + seq_last
    corr = 1.0 - jnp.sum(weight, axis=1, keepdims=True)        # (P, 1)

    if C >= _LANE:
        return _nlinear_moe_batched(x, weight, bias_col, corr)
    return _nlinear_moe_fold(x, weight, bias_col, corr)


if __name__ == "__main__":
    key = jax.random.PRNGKey(0)
    kx, kw, kb, kx2 = jax.random.split(key, 4)

    def reference(x, weight, bias):
        # Pure-JAX reference of the PyTorch forward (non-individual branch).
        seq_last = jnp.max(x, axis=1, keepdims=True)            # [B,1,C]  (module uses max)
        xc = x - seq_last
        return jnp.einsum("ps,bsc->bpc", weight, xc) + bias[None, :, None] + seq_last

    fwd = jax.jit(n_linear_moe_forward)

    # (1) Small shapes implied by the module (fold path, C < 128):
    #     past_history S=16, forecast_horizon P=8, num_series C=8, batch B=2.
    B, S, P, C = 2, 16, 8, 8
    x = jax.random.normal(kx, (B, S, C), dtype=jnp.float32)
    weight = jax.random.normal(kw, (P, S), dtype=jnp.float32) * 0.1
    bias = jax.random.normal(kb, (P,), dtype=jnp.float32) * 0.1

    out = jax.block_until_ready(fwd(x, weight, bias))
    ref = reference(x, weight, bias)
    assert out.shape == (B, P, C)
    assert jnp.allclose(out, ref, atol=1e-5, rtol=1e-5), "mismatch vs reference (fold path)"

    # (2) Lane-dense channel count (batched path, C >= 128, no wrapper fold/unfold).
    C2 = 128
    x2 = jax.random.normal(kx2, (B, S, C2), dtype=jnp.float32)
    out2 = jax.block_until_ready(fwd(x2, weight, bias))
    ref2 = reference(x2, weight, bias)
    assert out2.shape == (B, P, C2)
    assert jnp.allclose(out2, ref2, atol=1e-5, rtol=1e-5), "mismatch vs reference (batched path)"

    # TODO(synk): the `individual=True` branch (per-channel nn.Linear list) is not
    # implemented; the module defaults to the shared-Linear path reproduced here.
    print("KERNEL_OK")
</pallas_src>

<mosaic_0001>
module attributes {stable_mosaic.version = 11 : i64} {
  func.func @_nlinear_moe_kernel(%arg0: i32, %arg1: memref<16x128xf32, #tpu.memory_space<vmem>>, %arg2: memref<8x16xf32, #tpu.memory_space<vmem>>, %arg3: memref<8x1xf32, #tpu.memory_space<vmem>>, %arg4: memref<8x1xf32, #tpu.memory_space<vmem>>, %arg5: memref<8x128xf32, #tpu.memory_space<vmem>>) attributes {dimension_semantics = [#tpu.dimension_semantics<parallel>], iteration_bounds = array<i64: 1>, scalar_prefetch = 0 : i64, scratch_operands = 0 : i64, tpu.core_type = #tpu.core_type<tc>, window_params = [{transform_indices = @transform_0, window_bounds = array<i64: 16, 128>}, {pipeline_mode = #tpu.pipeline_mode<synchronous>, transform_indices = @transform_1, window_bounds = array<i64: 8, 16>}, {pipeline_mode = #tpu.pipeline_mode<synchronous>, transform_indices = @transform_2, window_bounds = array<i64: 8, 1>}, {pipeline_mode = #tpu.pipeline_mode<synchronous>, transform_indices = @transform_3, window_bounds = array<i64: 8, 1>}, {transform_indices = @transform_4, window_bounds = array<i64: 8, 128>}]} {
    %c0 = arith.constant 0 : index
    %c0_0 = arith.constant 0 : index
    %0 = vector.load %arg1[%c0, %c0_0] : memref<16x128xf32, #tpu.memory_space<vmem>>, vector<16x128xf32>
    %cst = arith.constant dense<0xFF800000> : vector<128xf32>
    %1 = vector.multi_reduction <maximumf>, %0, %cst [0] : vector<16x128xf32> to vector<128xf32>
    %2 = vector.shape_cast %1 : vector<128xf32> to vector<1x128xf32>
    %c0_1 = arith.constant 0 : index
    %c0_2 = arith.constant 0 : index
    %3 = vector.load %arg2[%c0_1, %c0_2] : memref<8x16xf32, #tpu.memory_space<vmem>>, vector<8x16xf32>
    %cst_3 = arith.constant dense<0.000000e+00> : vector<8x128xf32>
    %4 = tpu.matmul %3, %0, %cst_3 {dimension_numbers = #tpu.dot_dimension_numbers<[1], [0], [0], [1], [0, 0, 1, 1], [], []>} : vector<8x16xf32>, vector<16x128xf32>, vector<8x128xf32> -> vector<8x128xf32>
    %c0_4 = arith.constant 0 : index
    %c0_5 = arith.constant 0 : index
    %5 = vector.load %arg3[%c0_4, %c0_5] : memref<8x1xf32, #tpu.memory_space<vmem>>, vector<8x1xf32>
    %6 = vector.broadcast %5 : vector<8x1xf32> to vector<8x128xf32>
    %7 = arith.addf %4, %6 : vector<8x128xf32>
    %c0_6 = arith.constant 0 : index
    %c0_7 = arith.constant 0 : index
    %8 = vector.load %arg4[%c0_6, %c0_7] : memref<8x1xf32, #tpu.memory_space<vmem>>, vector<8x1xf32>
    %9 = vector.broadcast %8 : vector<8x1xf32> to vector<8x128xf32>
    %10 = vector.broadcast %2 : vector<1x128xf32> to vector<8x128xf32>
    %11 = arith.mulf %9, %10 : vector<8x128xf32>
    %12 = arith.addf %7, %11 : vector<8x128xf32>
    %c0_8 = arith.constant 0 : index
    %c0_9 = arith.constant 0 : index
    %13 = vector.load %arg5[%c0_8, %c0_9] : memref<8x128xf32, #tpu.memory_space<vmem>>, vector<8x128xf32>
    tpu.vector_store %arg5[%c0_8, %c0_9], %12 {strides = array<i32>} : memref<8x128xf32, #tpu.memory_space<vmem>>, vector<8x128xf32>,
    return
  }
  func.func @transform_0(%arg0: i32) -> (i32, i32) {
    %c0_i32 = arith.constant 0 : i32
    %c0_i32_0 = arith.constant 0 : i32
    return %c0_i32, %arg0 : i32, i32
  }
  func.func @transform_1(%arg0: i32) -> (i32, i32) {
    %c0_i32 = arith.constant 0 : i32
    %c0_i32_0 = arith.constant 0 : i32
    %c0_i32_1 = arith.constant 0 : i32
    return %c0_i32, %c0_i32_0 : i32, i32
  }
  func.func @transform_2(%arg0: i32) -> (i32, i32) {
    %c0_i32 = arith.constant 0 : i32
    %c0_i32_0 = arith.constant 0 : i32
    %c0_i32_1 = arith.constant 0 : i32
    return %c0_i32, %c0_i32_0 : i32, i32
  }
  func.func @transform_3(%arg0: i32) -> (i32, i32) {
    %c0_i32 = arith.constant 0 : i32
    %c0_i32_0 = arith.constant 0 : i32
    %c0_i32_1 = arith.constant 0 : i32
    return %c0_i32, %c0_i32_0 : i32, i32
  }
  func.func @transform_4(%arg0: i32) -> (i32, i32) {
    %c0_i32 = arith.constant 0 : i32
    %c0_i32_0 = arith.constant 0 : i32
    return %c0_i32, %arg0 : i32, i32
  }
}

</mosaic_0001>

<llo_original>
// kernel: n_linear_moe_forward.1
$region0: #{n_linear_moe_forward.1}
  #allocation0 [shape = 'u32[]', space=smem, size = 0x4, offset = 0x4, fixed_abs, tag = 'smem constant byte address 0x4 - core index']
  #allocation1 [shape = 'u32[72,128]{1,0:T(1,128)}', space=vmem, size = 0x9000, scoped, tag = 'internal scratch']
  %s0 = inlined_call_operand.vmem [shape: f32[16,128], index: 0, kind: input, shape index: {}]
  %s1 = inlined_call_operand.vmem [shape: f32[8,16], index: 1, kind: input, shape index: {}]
  %s2 = inlined_call_operand.vmem [shape: f32[8,1], index: 2, kind: input, shape index: {}]
  %s3 = inlined_call_operand.vmem [shape: f32[8,1], index: 3, kind: input, shape index: {}]
  %s4 = inlined_call_operand.vmem [shape: f32[8,128], index: 4, kind: output, shape index: {}]
  %s5 = sld [smem:[#allocation0]]
  $region26: #{n_linear_moe_forward.1} parent=0
    _
  %s7 = ssub.s32 1, %s5
  %s8 = scalar_select 0, %s7, %s5
  // Predicated region
  $region2: #{n_linear_moe_forward.1} parent=0 // pred_check
    _
  $region3: #{n_linear_moe_forward.1} parent=0 // pred_check_branch
    %10 = sbr.rel (0) target = $region5
  $region4: #{n_linear_moe_forward.1} parent=0 // pred_region
    _
  $region5: #{n_linear_moe_forward.1} parent=0 // pred_fallthru
    _
  // Predicated region
  $region6: #{n_linear_moe_forward.1} parent=0 // pred_check
    _
  $region7: #{n_linear_moe_forward.1} parent=0 // pred_check_branch
    %12 = sbr.rel (0) target = $region9
  $region8: #{n_linear_moe_forward.1} parent=0 // pred_region
    _
  $region9: #{n_linear_moe_forward.1} parent=0 // pred_fallthru
    _
  // Predicated region
  $region10: #{n_linear_moe_forward.1} parent=0 // pred_check
    _
  $region11: #{n_linear_moe_forward.1} parent=0 // pred_check_branch
    %14 = sbr.rel (0) target = $region13
  $region12: #{n_linear_moe_forward.1} parent=0 // pred_region
    _
  $region13: #{n_linear_moe_forward.1} parent=0 // pred_fallthru
    _
  // Predicated region
  $region14: #{n_linear_moe_forward.1} parent=0 // pred_check
    _
  $region15: #{n_linear_moe_forward.1} parent=0 // pred_check_branch
    %16 = sbr.rel (0) target = $region17
  $region16: #{n_linear_moe_forward.1} parent=0 // pred_region
    _
  $region17: #{n_linear_moe_forward.1} parent=0 // pred_fallthru
    _
  %v17 = vld [vmem:[%s0] sm:$0xff]
  %v18 = vld [vmem:[%s0 + $0x8] sm:$0xff]
  %v19 = vmax.f32 %v17, %v18
  %v20 = vrot.slane %v19, 4
  %v21 = vmax.f32 %v19, %v20
  %v22 = vrot.slane %v21, 2
  %v23 = vmax.f32 %v21, %v22
  %v24 = vrot.slane %v23, 1
  %v25 = vmax.f32 %v23, %v24
  %v26 = vld [vmem:[%s1] sm:$0xff]
  %v27 = vld [vmem:[%s2] sm:$0xff]
  %29 = vset.pattern.permute.xlu0 0
  %30 = vperm.xlu0 %29, %v27
  %v31 = vpop.permute.xlu0 %30
  %vm33 = vcmask 130048
  %v35 = vsel %vm33, %v26, 0
  %37 = vmatpush.msra.mxu0 0.0
  %38 = vmatpush.msra.mxu0 0.0
  %39 = vmatpush.msra.mxu0 0.0
  %40 = vmatpush.msra.mxu0 0.0
  %41 = vmatpush.msra.mxu0 0.0
  %42 = vmatpush.msra.mxu0 0.0
  %43 = vmatpush.msra.mxu0 0.0
  %44 = vmatpush.msra.mxu0 0.0
  %45 = vmatpush.msra.mxu0 0.0
  %46 = vmatpush.msra.mxu0 0.0
  %47 = vmatpush.msra.mxu0 0.0
  %48 = vmatpush.msra.mxu0 0.0
  %49 = vmatpush.msra.mxu0 0.0
  %50 = vmatpush.msra.mxu0 0.0
  %51 = vmatpush.msra.mxu0 %v18
  %52 = vmatpush.msra.mxu0 %v17
  %53 = vmatmul.f32.gmra.mxu0 %v35
  %v54 = vpop.f32.mrf.mxu0
  %v55 = vadd.f32 %v31, %v54
  %56 = vdwg.mxu0
  %v57 = vld [vmem:[%s3] sm:$0xff]
  %59 = vset.pattern.permute.xlu0 0
  %60 = vperm.xlu0 %59, %v57
  %v61 = vpop.permute.xlu0 %60
  %v63 = vmul.f32 %v61, %v25
  %v64 = vadd.f32 %v55, %v63
  %65 = vst [vmem:[%s4] sm:$0xff] %v64
  // Predicated region
  $region18: #{n_linear_moe_forward.1} parent=0 // pred_check
    _
  $region19: #{n_linear_moe_forward.1} parent=0 // pred_check_branch
    %67 = sbr.rel (0) target = $region21
  $region20: #{n_linear_moe_forward.1} parent=0 // pred_region
    _
  $region21: #{n_linear_moe_forward.1} parent=0 // pred_fallthru
    _
  // Predicated region
  $region22: #{n_linear_moe_forward.1} parent=0 // pred_check
    _
  $region23: #{n_linear_moe_forward.1} parent=0 // pred_check_branch
    %69 = sbr.rel (0) target = $region25
  $region24: #{n_linear_moe_forward.1} parent=0 // pred_region
    _
  $region25: #{n_linear_moe_forward.1} parent=0 // pred_fallthru
    _

</llo_original>
